<compile_context>
chip_gen: v5e
topology: v5e:2x2
jax: 0.10.0
libtpu: 0.0.40
codegen_flags: <defaults>
</compile_context>

<pallas_src>
import functools

import jax
import jax.numpy as jnp
from jax.experimental import pallas as pl
from jax.experimental.pallas import tpu as pltpu

LANES = 128


def _round_up(a: int, b: int) -> int:
    return ((a + b - 1) // b) * b


def _agg_kernel(adj_ref, m_ref, b_ref, out_ref, acc_ref, *, apply_relu: bool):
    """One (row-tile, K-tile) grid step of  out = A_hat @ M + b  (+ optional ReLU).

    Grid = (row tiles, K tiles). K (columns of A_hat) is the reduction axis:
    the f32 accumulator lives in VMEM scratch, zeroed at k == 0; bias, activation
    and the lane-dense store happen at the last K step.
    """
    k = pl.program_id(1)

    @pl.when(k == 0)
    def _init():
        acc_ref[...] = jnp.zeros_like(acc_ref)

    # bf16 operands, f32 accumulation on the MXU.
    acc_ref[...] += jnp.dot(
        adj_ref[...], m_ref[...], preferred_element_type=jnp.float32
    )

    @pl.when(k == pl.num_programs(1) - 1)
    def _finalize():
        r = acc_ref[...] + b_ref[...]
        if apply_relu:
            r = jnp.maximum(r, 0.0)
        out_ref[...] = r.astype(out_ref.dtype)


def _aggregate(adj_hat, m, bias, *, apply_relu, out_dtype, tile):
    """Tiled pallas_call computing  relu?(adj_hat @ m + bias).

    adj_hat: [Np, Np] bf16 (zero padded), m: [Np, Fp] bf16, bias: [1, Fp] f32.
    Returns [Np, Fp] in out_dtype.
    """
    n_pad = adj_hat.shape[0]
    f_pad = m.shape[1]
    grid = (n_pad // tile, n_pad // tile)

    kernel = functools.partial(_agg_kernel, apply_relu=apply_relu)

    return pl.pallas_call(
        kernel,
        out_shape=jax.ShapeDtypeStruct((n_pad, f_pad), out_dtype),
        grid_spec=pltpu.PrefetchScalarGridSpec(
            num_scalar_prefetch=0,
            grid=grid,
            in_specs=[
                # A_hat tile, streamed over both grid axes.
                pl.BlockSpec((tile, tile), lambda i, k: (i, k)),
                # Feature slab: depends only on k; lane-dense (f_pad multiple of 128).
                pl.BlockSpec((tile, f_pad), lambda i, k: (k, 0)),
                # Bias: pinned block (never re-indexed across the grid).
                pl.BlockSpec((1, f_pad), lambda i, k: (0, 0)),
            ],
            out_specs=pl.BlockSpec((tile, f_pad), lambda i, k: (i, 0)),
            scratch_shapes=[pltpu.VMEM((tile, f_pad), jnp.float32)],
        ),
        compiler_params=pltpu.CompilerParams(
            # Row tiles shard across TensorCores; K is a sequential reduction.
            dimension_semantics=("parallel", "arbitrary"),
            vmem_limit_bytes=32 * 1024 * 1024,  # far above need; safe on 64 MiB v7x
        ),
    )(adj_hat, m, bias)


def house_gcn_forward(x, edge_index, w1, b1, w2, b2, *, tile=256):
    """x: [N, F_in] float32, edge_index: [2, E] int32 (row 0 = source, row 1 = target)."""
    n = x.shape[0]
    hidden = w1.shape[1]
    out_dim = w2.shape[1]

    # ---- glue: dense symmetric-normalized adjacency (PyG gcn_norm semantics) ----
    src = edge_index[0]
    tgt = edge_index[1]
    non_loop_w = (src != tgt).astype(jnp.float32)          # drop given self loops ...
    adj = jnp.zeros((n, n), jnp.float32).at[tgt, src].add(non_loop_w)  # scatter-ADD
    adj = adj + jnp.eye(n, dtype=jnp.float32)               # ... add unit self loops
    deg = jnp.sum(adj, axis=1)
    dinv = jnp.where(deg > 0, jax.lax.rsqrt(deg), 0.0)
    adj_hat = dinv[:, None] * adj * dinv[None, :]            # D^-1/2 (A+I) D^-1/2

    # ---- padding so the grid tiles evenly and stores are lane-dense ----
    tile = min(tile, _round_up(n, LANES))
    n_pad = _round_up(n, tile)
    f1_pad = _round_up(hidden, LANES)
    f2_pad = _round_up(out_dim, LANES)

    adj_hat_p = jnp.pad(adj_hat, ((0, n_pad - n), (0, n_pad - n))).astype(jnp.bfloat16)

    # ---- layer 1: h = relu(A_hat @ (x @ W1) + b1) ----
    m1 = jnp.dot(x, w1, preferred_element_type=jnp.float32)          # tiny GEMM: XLA
    m1 = jnp.pad(m1, ((0, n_pad - n), (0, f1_pad - hidden))).astype(jnp.bfloat16)
    b1p = jnp.pad(jnp.reshape(b1, (1, -1)).astype(jnp.float32),
                  ((0, 0), (0, f1_pad - hidden)))
    h = _aggregate(adj_hat_p, m1, b1p, apply_relu=True,
                   out_dtype=jnp.bfloat16, tile=tile)                 # [n_pad, f1_pad]

    # ---- layer 2: out = A_hat @ (h @ W2) + b2 ----
    w2p = jnp.pad(w2.astype(jnp.float32),
                  ((0, f1_pad - hidden), (0, f2_pad - out_dim)))
    m2 = jnp.dot(h.astype(jnp.float32), w2p, preferred_element_type=jnp.float32)
    m2 = m2.astype(jnp.bfloat16)                                      # [n_pad, f2_pad]
    b2p = jnp.pad(jnp.reshape(b2, (1, -1)).astype(jnp.float32),
                  ((0, 0), (0, f2_pad - out_dim)))
    out = _aggregate(adj_hat_p, m2, b2p, apply_relu=False,
                     out_dtype=jnp.float32, tile=tile)                # [n_pad, f2_pad]

    return out[:n, :out_dim]


if __name__ == "__main__":
    # Small-but-nontrivial synthetic graph: 512 nodes -> a real (2, 2) tile grid.
    N, INPUT_DIM, HIDDEN_DIM, OUTPUT_DIM, E = 512, 8, 32, 16, 2048

    key = jax.random.PRNGKey(0)
    kx, ke1, ke2, kw1, kb1, kw2, kb2 = jax.random.split(key, 7)

    x = jax.random.normal(kx, (N, INPUT_DIM), dtype=jnp.float32)
    edge_index = jnp.stack(
        [
            jax.random.randint(ke1, (E,), 0, N, dtype=jnp.int32),
            jax.random.randint(ke2, (E,), 0, N, dtype=jnp.int32),
        ],
        axis=0,
    )

    # GCNConv parameters: linear weight [in, out] + bias [out].
    w1 = jax.random.normal(kw1, (INPUT_DIM, HIDDEN_DIM), dtype=jnp.float32) * 0.1
    b1 = jax.random.normal(kb1, (HIDDEN_DIM,), dtype=jnp.float32) * 0.01
    w2 = jax.random.normal(kw2, (HIDDEN_DIM, OUTPUT_DIM), dtype=jnp.float32) * 0.1
    b2 = jax.random.normal(kb2, (OUTPUT_DIM,), dtype=jnp.float32) * 0.01

    out = house_gcn_forward(x, edge_index, w1, b1, w2, b2)
    out = jax.block_until_ready(out)
    assert out.shape == (N, OUTPUT_DIM)

    # Full-precision reference (same gcn_norm construction) — bf16 operands in the
    # kernel mean we check a relative error budget instead of 1e-5 tolerances.
    src, tgt = edge_index[0], edge_index[1]
    w = (src != tgt).astype(jnp.float32)
    adj = jnp.zeros((N, N), jnp.float32).at[tgt, src].add(w) + jnp.eye(N)
    dinv = jax.lax.rsqrt(jnp.sum(adj, axis=1))
    a_hat = dinv[:, None] * adj * dinv[None, :]
    h_ref = jnp.maximum(a_hat @ (x @ w1) + b1[None, :], 0.0)
    out_ref = a_hat @ (h_ref @ w2) + b2[None, :]

    rel_err = jnp.max(jnp.abs(out - out_ref)) / (jnp.max(jnp.abs(out_ref)) + 1e-8)
    assert rel_err < 3e-2, f"relative error too large: {rel_err}"

    print("KERNEL_OK")
</pallas_src>

<mosaic_0001>
module attributes {stable_mosaic.version = 11 : i64} {
  func.func @_agg_kernel(%arg0: i32, %arg1: i32, %arg2: memref<256x256xbf16, #tpu.memory_space<vmem>>, %arg3: memref<256x128xbf16, #tpu.memory_space<vmem>>, %arg4: memref<1x128xf32, #tpu.memory_space<vmem>>, %arg5: memref<256x128xbf16, #tpu.memory_space<vmem>>, %arg6: memref<256x128xf32, #tpu.memory_space<vmem>>) attributes {dimension_semantics = [#tpu.dimension_semantics<parallel>, #tpu.dimension_semantics<arbitrary>], iteration_bounds = array<i64: 2, 2>, scalar_prefetch = 0 : i64, scratch_operands = 1 : i64, tpu.core_type = #tpu.core_type<tc>, window_params = [{transform_indices = @transform_0, window_bounds = array<i64: 256, 256>}, {transform_indices = @transform_1, window_bounds = array<i64: 256, 128>}, {pipeline_mode = #tpu.pipeline_mode<synchronous>, transform_indices = @transform_2, window_bounds = array<i64: 1, 128>}, {transform_indices = @transform_3, window_bounds = array<i64: 256, 128>}]} {
    %c0_i32 = arith.constant 0 : i32
    %0 = arith.cmpi eq, %arg1, %c0_i32 : i32
    %1 = arith.extui %0 : i1 to i32
    %c0_i32_0 = arith.constant 0 : i32
    %2 = arith.cmpi ne, %1, %c0_i32_0 : i32
    scf.if %2 {
      %cst_9 = arith.constant 0.000000e+00 : f32
      %12 = vector.broadcast %cst_9 : f32 to vector<256x128xf32>
      %c0_10 = arith.constant 0 : index
      %c0_11 = arith.constant 0 : index
      %13 = vector.load %arg6[%c0_10, %c0_11] : memref<256x128xf32, #tpu.memory_space<vmem>>, vector<256x128xf32>
      tpu.vector_store %arg6[%c0_10, %c0_11], %12 {strides = array<i32>} : memref<256x128xf32, #tpu.memory_space<vmem>>, vector<256x128xf32>,
    } else {
    }
    %c0 = arith.constant 0 : index
    %c0_1 = arith.constant 0 : index
    %3 = vector.load %arg6[%c0, %c0_1] : memref<256x128xf32, #tpu.memory_space<vmem>>, vector<256x128xf32>
    %c0_2 = arith.constant 0 : index
    %c0_3 = arith.constant 0 : index
    %4 = vector.load %arg2[%c0_2, %c0_3] : memref<256x256xbf16, #tpu.memory_space<vmem>>, vector<256x256xbf16>
    %c0_4 = arith.constant 0 : index
    %c0_5 = arith.constant 0 : index
    %5 = vector.load %arg3[%c0_4, %c0_5] : memref<256x128xbf16, #tpu.memory_space<vmem>>, vector<256x128xbf16>
    %cst = arith.constant dense<0.000000e+00> : vector<256x128xf32>
    %6 = tpu.matmul %4, %5, %cst {dimension_numbers = #tpu.dot_dimension_numbers<[1], [0], [0], [1], [0, 0, 1, 1], [], []>} : vector<256x256xbf16>, vector<256x128xbf16>, vector<256x128xf32> -> vector<256x128xf32>
    %7 = arith.addf %3, %6 : vector<256x128xf32>
    %c0_6 = arith.constant 0 : index
    %c0_7 = arith.constant 0 : index
    %8 = vector.load %arg6[%c0_6, %c0_7] : memref<256x128xf32, #tpu.memory_space<vmem>>, vector<256x128xf32>
    tpu.vector_store %arg6[%c0_6, %c0_7], %7 {strides = array<i32>} : memref<256x128xf32, #tpu.memory_space<vmem>>, vector<256x128xf32>,
    %c1_i32 = arith.constant 1 : i32
    %9 = arith.cmpi eq, %arg1, %c1_i32 : i32
    %10 = arith.extui %9 : i1 to i32
    %c0_i32_8 = arith.constant 0 : i32
    %11 = arith.cmpi ne, %10, %c0_i32_8 : i32
    scf.if %11 {
      %c0_9 = arith.constant 0 : index
      %c0_10 = arith.constant 0 : index
      %12 = vector.load %arg6[%c0_9, %c0_10] : memref<256x128xf32, #tpu.memory_space<vmem>>, vector<256x128xf32>
      %c0_11 = arith.constant 0 : index
      %c0_12 = arith.constant 0 : index
      %13 = vector.load %arg4[%c0_11, %c0_12] : memref<1x128xf32, #tpu.memory_space<vmem>>, vector<1x128xf32>
      %14 = vector.broadcast %13 : vector<1x128xf32> to vector<256x128xf32>
      %15 = arith.addf %12, %14 : vector<256x128xf32>
      %cst_13 = arith.constant 0.000000e+00 : f32
      %16 = vector.broadcast %cst_13 : f32 to vector<256x128xf32>
      %17 = arith.maximumf %15, %16 : vector<256x128xf32>
      %18 = arith.truncf %17 : vector<256x128xf32> to vector<256x128xbf16>
      %c0_14 = arith.constant 0 : index
      %c0_15 = arith.constant 0 : index
      %19 = vector.load %arg5[%c0_14, %c0_15] : memref<256x128xbf16, #tpu.memory_space<vmem>>, vector<256x128xbf16>
      tpu.vector_store %arg5[%c0_14, %c0_15], %18 {strides = array<i32>} : memref<256x128xbf16, #tpu.memory_space<vmem>>, vector<256x128xbf16>,
    } else {
    }
    return
  }
  func.func @transform_0(%arg0: i32, %arg1: i32) -> (i32, i32) {
    %c0_i32 = arith.constant 0 : i32
    return %arg0, %arg1 : i32, i32
  }
  func.func @transform_1(%arg0: i32, %arg1: i32) -> (i32, i32) {
    %c0_i32 = arith.constant 0 : i32
    %c0_i32_0 = arith.constant 0 : i32
    return %arg1, %c0_i32 : i32, i32
  }
  func.func @transform_2(%arg0: i32, %arg1: i32) -> (i32, i32) {
    %c0_i32 = arith.constant 0 : i32
    %c0_i32_0 = arith.constant 0 : i32
    %c0_i32_1 = arith.constant 0 : i32
    return %c0_i32, %c0_i32_0 : i32, i32
  }
  func.func @transform_3(%arg0: i32, %arg1: i32) -> (i32, i32) {
    %c0_i32 = arith.constant 0 : i32
    %c0_i32_0 = arith.constant 0 : i32
    return %arg0, %c0_i32 : i32, i32
  }
}

</mosaic_0001>

<llo_original>
// kernel: tpu_custom_call.1
$region0: #{tpu_custom_call.1}
  #allocation0 [shape = 'u32[]', space=smem, size = 0x4, offset = 0x4, fixed_abs, tag = 'smem constant byte address 0x4 - core index']
  #allocation1 [shape = 'u32[72,128]{1,0:T(1,128)}', space=vmem, size = 0x9000, scoped, tag = 'internal scratch']
  #allocation2 [shape = 'f32[256,128]{1,0:T(8,128)}', space=vmem, size = 0x20000, scoped, tag = 'scratch operand']
  %s0 = inlined_call_operand.hbm [shape: bf16[512,512], index: 0, kind: input, shape index: {}]
  %s1 = inlined_call_operand.hbm [shape: bf16[512,128], index: 1, kind: input, shape index: {}]
  %s2 = inlined_call_operand.vmem [shape: f32[1,128], index: 2, kind: input, shape index: {}]
  %s3 = inlined_call_operand.hbm [shape: bf16[512,128], index: 3, kind: output, shape index: {}]
  %s4 = sld [smem:[#allocation0]]
  $region61: #{tpu_custom_call.1} parent=0
    _
  %s6 = ssub.s32 1, %s4
  %s7 = scalar_select 0, %s6, %s4
  $region1: #{tpu_custom_call.1} parent=0
    #allocation3 [shape = 'u8[262144]{0}', space=vmem, size = 0x40000, scoped, tag = 'input window, operand 0']
    #allocation4 [shape = 's32[2]{0}', space=sflag, size = 0x8, scoped, tag = 'scoped memory for tpu_custom_call.1']
    #allocation5 [shape = 's32[2]{0}', space=sflag, size = 0x8, scoped, tag = 'scoped memory for tpu_custom_call.1']
    #allocation6 [shape = 'u8[131072]{0}', space=vmem, size = 0x20000, scoped, tag = 'input window, operand 1']
    #allocation7 [shape = 's32[2]{0}', space=sflag, size = 0x8, scoped, tag = 'scoped memory for tpu_custom_call.1']
    #allocation8 [shape = 'u8[131072]{0}', space=vmem, size = 0x20000, scoped, tag = 'output window, operand 0']
    %8 = vsyncpa [#allocation4], 0
    %s9 = scalar_lea.sflag [#allocation4], 1
    %10 = vsyncpa %s9, 0
    %11 = vsyncpa [#allocation7], 0
    %s12 = scalar_lea.sflag [#allocation7], 1
    %13 = vsyncpa %s12, 0
    %14 = vsyncpa [#allocation5], 0
    %s15 = scalar_lea.sflag [#allocation5], 1
    %16 = vsyncpa %s15, 0
    loop: start=0, step=1, limit=6
    $region2: #{tpu_custom_call.1} parent=1 // loop_pre_header
      _
    $region3: #{tpu_custom_call.1} parent=1 // loop_header
      %s18 = sphi 0, %s22
      %p19 = scmp.ge.s32.totalorder %s18, 6
      %s25 = sphi 0, %s37
      %s26 = sphi 0, %s33
      %s27 = sphi 0, %s25
      %s28 = sphi 0, %s26
      %s29 = sphi 0, %s27
      %s30 = sphi 0, %s28
      %s42 = sphi 0, %s44
      %s45 = sphi 0, %s42
      %s46 = sphi 0, %s45
      %s62 = sphi 0, %s46
      %s68 = sphi 0, %s70
      %s71 = sphi 0, %s68
      %s72 = sphi 0, %s71
      %s88 = sphi 0, %s72
      %s92 = sphi 0, %s92
      %s94 = sphi 0, %s92
      %s95 = sphi 0, %s94
      %s109 = sphi 0, %s95
      %s115 = sphi 0, %s117
      %s118 = sphi 0, %s115
      %s119 = sphi 0, %s118
      %s135 = sphi 0, %s119
    $region4: #{tpu_custom_call.1} parent=1 // loop_header_branch
      %21 = sbr.rel (%p19) target = $region8
    $region5: #{tpu_custom_call.1} parent=1 // loop_body
      %s23 = ssub.s32 %s18, 1
      %s24 = ssub.s32 %s18, 2
      %s31 = sadd.s32 1, %s26
      %p32 = scmp.ge.s32.totalorder %s31, 2
      %s33 = scalar_select %p32, 0, %s31
      %s34 = sadd.s32 1, %s25
      %s35 = scalar_select %p32, %s34, %s25
      %p36 = scmp.ge.s32.totalorder %s35, 2
      %s37 = scalar_select %p36, 0, %s35
      %s38 = ssub.s32 %s25, %s37
      %s39 = ssub.s32 %s26, %s33
      %s40 = sor.u32 %s38, %s39
      %p41 = scmp.eq.s32.totalorder %s40, 0
      %s43 = sadd.s32 %s42, 1
      %s44 = scalar_select %p41, %s42, %s43
      %p47 = pneg %p41
      %p48 = scmp.eq.s32.totalorder %s18, 3
      %p49 = por %p47, %p48
      %p50 = scmp.ne.s32.totalorder %s42, %s45
      %p51 = scmp.eq.s32.totalorder %s18, 0
      %p52 = por %p50, %p51
      %p53 = scmp.ne.s32.totalorder %s42, %s45
      %p54 = scmp.eq.s32.totalorder %s23, 3
      %p55 = por %p53, %p54
      %p56 = scmp.ne.s32.totalorder %s45, %s46
      %p57 = scmp.eq.s32.totalorder %s23, 0
      %p58 = por %p56, %p57
      %p59 = scmp.ne.s32.totalorder %s45, %s46
      %p60 = scmp.eq.s32.totalorder %s24, 3
      %p61 = por %p59, %p60
      %p63 = scmp.ne.s32.totalorder %s46, %s62
      %p64 = scmp.eq.s32.totalorder %s24, 0
      %p65 = por %p63, %p64
      %s66 = ssub.s32 %s26, %s33
      %p67 = scmp.eq.s32.totalorder %s66, 0
      %s69 = sadd.s32 %s68, 1
      %s70 = scalar_select %p67, %s68, %s69
      %p73 = pneg %p67
      %p74 = scmp.eq.s32.totalorder %s18, 3
      %p75 = por %p73, %p74
      %p76 = scmp.ne.s32.totalorder %s68, %s71
      %p77 = scmp.eq.s32.totalorder %s18, 0
      %p78 = por %p76, %p77
      %p79 = scmp.ne.s32.totalorder %s68, %s71
      %p80 = scmp.eq.s32.totalorder %s23, 3
      %p81 = por %p79, %p80
      %p82 = scmp.ne.s32.totalorder %s71, %s72
      %p83 = scmp.eq.s32.totalorder %s23, 0
      %p84 = por %p82, %p83
      %p85 = scmp.ne.s32.totalorder %s71, %s72
      %p86 = scmp.eq.s32.totalorder %s24, 3
      %p87 = por %p85, %p86
      %p89 = scmp.ne.s32.totalorder %s72, %s88
      %p90 = scmp.eq.s32.totalorder %s24, 0
      %p91 = por %p89, %p90
      %s93 = sadd.s32 %s92, 1
      %p96 = scmp.eq.s32.totalorder %s18, 3
      %p97 = scmp.ne.s32.totalorder %s92, %s94
      %p98 = scmp.eq.s32.totalorder %s18, 0
      %p99 = por %p97, %p98
      %p100 = scmp.ne.s32.totalorder %s92, %s94
      %p101 = scmp.eq.s32.totalorder %s23, 3
      %p102 = por %p100, %p101
      %p103 = scmp.ne.s32.totalorder %s94, %s95
      %p104 = scmp.eq.s32.totalorder %s23, 0
      %p105 = por %p103, %p104
      %p106 = scmp.ne.s32.totalorder %s94, %s95
      %p107 = scmp.eq.s32.totalorder %s24, 3
      %p108 = por %p106, %p107
      %p110 = scmp.ne.s32.totalorder %s95, %s109
      %p111 = scmp.eq.s32.totalorder %s24, 0
      %p112 = por %p110, %p111
      %s113 = ssub.s32 %s25, %s37
      %p114 = scmp.eq.s32.totalorder %s113, 0
      %s116 = sadd.s32 %s115, 1
      %s117 = scalar_select %p114, %s115, %s116
      %p120 = pneg %p114
      %p121 = scmp.eq.s32.totalorder %s18, 3
      %p122 = por %p120, %p121
      %p123 = scmp.ne.s32.totalorder %s115, %s118
      %p124 = scmp.eq.s32.totalorder %s18, 0
      %p125 = por %p123, %p124
      %p126 = scmp.ne.s32.totalorder %s115, %s118
      %p127 = scmp.eq.s32.totalorder %s23, 3
      %p128 = por %p126, %p127
      %p129 = scmp.ne.s32.totalorder %s118, %s119
      %p130 = scmp.eq.s32.totalorder %s23, 0
      %p131 = por %p129, %p130
      %p132 = scmp.ne.s32.totalorder %s118, %s119
      %p133 = scmp.eq.s32.totalorder %s24, 3
      %p134 = por %p132, %p133
      %p136 = scmp.ne.s32.totalorder %s119, %s135
      %p137 = scmp.eq.s32.totalorder %s24, 0
      %p138 = por %p136, %p137
      %p139 = scmp.le.s32.totalorder 1, %s18
      %p140 = scmp.lt.s32.totalorder %s18, 5
      %p141 = pnand %p139, %p140
      %p142 = pneg %p141
      // Predicated region
      $region9: #{tpu_custom_call.1} parent=5 // pred_check
        _
      $region10: #{tpu_custom_call.1} parent=5 // pred_check_branch
        %144 = sbr.rel (%p141) target = $region12
      $region11: #{tpu_custom_call.1} parent=5 // pred_region
        %s145 = ssub.s32 %s18, 1
        // Predicated region
        $region13: #{tpu_custom_call.1} parent=11 // pred_check
          %p146 = pneg %p105
        $region14: #{tpu_custom_call.1} parent=11 // pred_check_branch
          %148 = sbr.rel (%p146) target = $region16
        $region15: #{tpu_custom_call.1} parent=11 // pred_region
          _
        $region16: #{tpu_custom_call.1} parent=11 // pred_fallthru
          _
      $region12: #{tpu_custom_call.1} parent=5 // pred_fallthru
        _
      %p149 = scmp.lt.s32.totalorder %s18, 4
      // Predicated region
      $region17: #{tpu_custom_call.1} parent=5 // pred_check
        %p150 = pneg %p149
      $region18: #{tpu_custom_call.1} parent=5 // pred_check_branch
        %152 = sbr.rel (%p150) target = $region20
      $region19: #{tpu_custom_call.1} parent=5 // pred_region
        // Predicated region
        $region21: #{tpu_custom_call.1} parent=19 // pred_check
          %p153 = pneg %p52
        $region22: #{tpu_custom_call.1} parent=19 // pred_check_branch
          %155 = sbr.rel (%p153) target = $region24
        $region23: #{tpu_custom_call.1} parent=19 // pred_region
          %s156 = sand.u32 %s42, 1
          %s157 = scalar_lea.sflag [#allocation4], %s156
          %s158 = sand.u32 %s42, 1
          %s159 = smul.addr %s158, 256
          %s160 = scalar_lea.vmem [#allocation3], %s159
          %s161 = smul.u32 32, %s25
          %s162 = smul.u32 2, %s26
          %164 = vsyncadd %s157, 0
          %s165 = smul.addr %s161, 4
          %s166 = sadd.s32 %s162, %s165
          %s167 = smul.addr %s166, 4
          %s168 = scalar_lea.hbm %s0, %s167
          %s169 = sshll.u32 %s168, 4
          %s170 = int_to_ptr.hbm [resolvable:$true] %s169
          %s171 = sshll.u32 %s160, 4
          %s172 = int_to_ptr.vmem [resolvable:$true] %s171
          %177 = dma.hbm_to_vmem [thread:$0]  %s170, 4096, %s172, %s157, 256, 128, 8
        $region24: #{tpu_custom_call.1} parent=19 // pred_fallthru
          _
        // Predicated region
        $region25: #{tpu_custom_call.1} parent=19 // pred_check
          %p178 = pneg %p78
        $region26: #{tpu_custom_call.1} parent=19 // pred_check_branch
          %180 = sbr.rel (%p178) target = $region28
        $region27: #{tpu_custom_call.1} parent=19 // pred_region
          %s181 = sand.u32 %s68, 1
          %s182 = scalar_lea.sflag [#allocation7], %s181
          %s183 = sand.u32 %s68, 1
          %s184 = smul.addr %s183, 128
          %s185 = scalar_lea.vmem [#allocation6], %s184
          %s186 = smul.u32 32, %s26
          %188 = vsyncadd %s182, 0
          %s189 = smul.addr %s186, 4
          %s190 = scalar_lea.hbm %s1, %s189
          %s191 = sshll.u32 %s190, 4
          %s192 = int_to_ptr.hbm [resolvable:$true] %s191
          %s193 = sshll.u32 %s185, 4
          %s194 = int_to_ptr.vmem [resolvable:$true] %s193
          %199 = dma.hbm_to_vmem [thread:$0]  %s192, 2048, %s194, %s182, 64, 64, 4
        $region28: #{tpu_custom_call.1} parent=19 // pred_fallthru
          _
      $region20: #{tpu_custom_call.1} parent=5 // pred_fallthru
        _
      %p200 = scmp.le.s32.totalorder 1, %s18
      %p201 = scmp.lt.s32.totalorder %s18, 5
      %p202 = pnand %p200, %p201
      %p203 = pneg %p202
      // Predicated region
      $region29: #{tpu_custom_call.1} parent=5 // pred_check
        _
      $region30: #{tpu_custom_call.1} parent=5 // pred_check_branch
        %205 = sbr.rel (%p202) target = $region32
      $region31: #{tpu_custom_call.1} parent=5 // pred_region
        %s206 = ssub.s32 %s18, 1
        %s207 = sand.u32 %s45, 1
        %s208 = scalar_lea.sflag [#allocation4], %s207
        %s209 = sand.u32 %s45, 1
        %s210 = smul.addr %s209, 256
        %s211 = scalar_lea.vmem [#allocation3], %s210
        // Predicated region
        $region33: #{tpu_custom_call.1} parent=31 // pred_check
          %p212 = pneg %p58
        $region34: #{tpu_custom_call.1} parent=31 // pred_check_branch
          %214 = sbr.rel (%p212) target = $region36
        $region35: #{tpu_custom_call.1} parent=31 // pred_region
          %216 = dma.done %s208, 4096
        $region36: #{tpu_custom_call.1} parent=31 // pred_fallthru
          _
        %s217 = sand.u32 %s71, 1
        %s218 = scalar_lea.sflag [#allocation7], %s217
        %s219 = sand.u32 %s71, 1
        %s220 = smul.addr %s219, 128
        %s221 = scalar_lea.vmem [#allocation6], %s220
        // Predicated region
        $region37: #{tpu_custom_call.1} parent=31 // pred_check
          %p222 = pneg %p84
        $region38: #{tpu_custom_call.1} parent=31 // pred_check_branch
          %224 = sbr.rel (%p222) target = $region40
        $region39: #{tpu_custom_call.1} parent=31 // pred_region
          %226 = dma.done %s218, 2048
        $region40: #{tpu_custom_call.1} parent=31 // pred_fallthru
          _
        %s227 = sand.u32 %s45, 1
        %s228 = scalar_lea.sflag [#allocation4], %s227
        %s229 = sand.u32 %s45, 1
        %s230 = smul.addr %s229, 256
        %s231 = scalar_lea.vmem [#allocation3], %s230
        %p232 = pneg %p58
        %p233 = pneg %p55
        %s234 = sand.u32 %s71, 1
        %s235 = scalar_lea.sflag [#allocation7], %s234
        %s236 = sand.u32 %s71, 1
        %s237 = smul.addr %s236, 128
        %s238 = scalar_lea.vmem [#allocation6], %s237
        %p239 = pneg %p84
        %p240 = pneg %p81
        %p241 = pneg %p105
        %p242 = pneg %p102
        %p243 = pneg %p131
        %p244 = pneg %p128
        %s245 = sand.u32 %s118, 1
        %s246 = scalar_lea.sflag [#allocation5], %s245
        %s247 = sand.u32 %s118, 1
        %s248 = smul.addr %s247, 128
        %s249 = scalar_lea.vmem [#allocation8], %s248
        %s250 = smul.u32 32, %s27
        %s251 = smul.u32 2, %s28
        %s252 = smul.u32 32, %s28
        %s253 = smul.u32 32, %s27
        %p254 = scmp.eq.s32.totalorder %s28, 0
        // Predicated region
        $region41: #{tpu_custom_call.1} parent=31 // pred_check
          %p255 = pneg %p254
        $region42: #{tpu_custom_call.1} parent=31 // pred_check_branch
          %257 = sbr.rel (%p255) target = $region44
        $region43: #{tpu_custom_call.1} parent=31 // pred_region
          %258 = vst [vmem:[#allocation2] sm:$0xff] 0.0
          %259 = vst [vmem:[#allocation2 + $0x8] sm:$0xff] 0.0
          %260 = vst [vmem:[#allocation2 + $0x10] sm:$0xff] 0.0
          %261 = vst [vmem:[#allocation2 + $0x18] sm:$0xff] 0.0
          %262 = vst [vmem:[#allocation2 + $0x20] sm:$0xff] 0.0
          %263 = vst [vmem:[#allocation2 + $0x28] sm:$0xff] 0.0
          %264 = vst [vmem:[#allocation2 + $0x30] sm:$0xff] 0.0
          %265 = vst [vmem:[#allocation2 + $0x38] sm:$0xff] 0.0
          %266 = vst [vmem:[#allocation2 + $0x40] sm:$0xff] 0.0
          %267 = vst [vmem:[#allocation2 + $0x48] sm:$0xff] 0.0
          %268 = vst [vmem:[#allocation2 + $0x50] sm:$0xff] 0.0
          %269 = vst [vmem:[#allocation2 + $0x58] sm:$0xff] 0.0
          %270 = vst [vmem:[#allocation2 + $0x60] sm:$0xff] 0.0
          %271 = vst [vmem:[#allocation2 + $0x68] sm:$0xff] 0.0
          %272 = vst [vmem:[#allocation2 + $0x70] sm:$0xff] 0.0
          %273 = vst [vmem:[#allocation2 + $0x78] sm:$0xff] 0.0
          %274 = vst [vmem:[#allocation2 + $0x80] sm:$0xff] 0.0
          %275 = vst [vmem:[#allocation2 + $0x88] sm:$0xff] 0.0
          %276 = vst [vmem:[#allocation2 + $0x90] sm:$0xff] 0.0
          %277 = vst [vmem:[#allocation2 + $0x98] sm:$0xff] 0.0
          %278 = vst [vmem:[#allocation2 + $0xa0] sm:$0xff] 0.0
          %279 = vst [vmem:[#allocation2 + $0xa8] sm:$0xff] 0.0
          %280 = vst [vmem:[#allocation2 + $0xb0] sm:$0xff] 0.0
          %281 = vst [vmem:[#allocation2 + $0xb8] sm:$0xff] 0.0
          %282 = vst [vmem:[#allocation2 + $0xc0] sm:$0xff] 0.0
          %283 = vst [vmem:[#allocation2 + $0xc8] sm:$0xff] 0.0
          %284 = vst [vmem:[#allocation2 + $0xd0] sm:$0xff] 0.0
          %285 = vst [vmem:[#allocation2 + $0xd8] sm:$0xff] 0.0
          %286 = vst [vmem:[#allocation2 + $0xe0] sm:$0xff] 0.0
          %287 = vst [vmem:[#allocation2 + $0xe8] sm:$0xff] 0.0
          %288 = vst [vmem:[#allocation2 + $0xf0] sm:$0xff] 0.0
          %289 = vst [vmem:[#allocation2 + $0xf8] sm:$0xff] 0.0
        $region44: #{tpu_custom_call.1} parent=31 // pred_fallthru
          _
        %v290 = vld [vmem:[#allocation2] sm:$0xff]
        %v291 = vld [vmem:[#allocation2 + $0x8] sm:$0xff]
        %v292 = vld [vmem:[#allocation2 + $0x10] sm:$0xff]
        %v293 = vld [vmem:[#allocation2 + $0x18] sm:$0xff]
        %v294 = vld [vmem:[#allocation2 + $0x20] sm:$0xff]
        %v295 = vld [vmem:[#allocation2 + $0x28] sm:$0xff]
        %v296 = vld [vmem:[#allocation2 + $0x30] sm:$0xff]
        %v297 = vld [vmem:[#allocation2 + $0x38] sm:$0xff]
        %v298 = vld [vmem:[#allocation2 + $0x40] sm:$0xff]
        %v299 = vld [vmem:[#allocation2 + $0x48] sm:$0xff]
        %v300 = vld [vmem:[#allocation2 + $0x50] sm:$0xff]
        %v301 = vld [vmem:[#allocation2 + $0x58] sm:$0xff]
        %v302 = vld [vmem:[#allocation2 + $0x60] sm:$0xff]
        %v303 = vld [vmem:[#allocation2 + $0x68] sm:$0xff]
        %v304 = vld [vmem:[#allocation2 + $0x70] sm:$0xff]
        %v305 = vld [vmem:[#allocation2 + $0x78] sm:$0xff]
        %v306 = vld [vmem:[#allocation2 + $0x80] sm:$0xff]
        %v307 = vld [vmem:[#allocation2 + $0x88] sm:$0xff]
        %v308 = vld [vmem:[#allocation2 + $0x90] sm:$0xff]
        %v309 = vld [vmem:[#allocation2 + $0x98] sm:$0xff]
        %v310 = vld [vmem:[#allocation2 + $0xa0] sm:$0xff]
        %v311 = vld [vmem:[#allocation2 + $0xa8] sm:$0xff]
        %v312 = vld [vmem:[#allocation2 + $0xb0] sm:$0xff]
        %v313 = vld [vmem:[#allocation2 + $0xb8] sm:$0xff]
        %v314 = vld [vmem:[#allocation2 + $0xc0] sm:$0xff]
        %v315 = vld [vmem:[#allocation2 + $0xc8] sm:$0xff]
        %v316 = vld [vmem:[#allocation2 + $0xd0] sm:$0xff]
        %v317 = vld [vmem:[#allocation2 + $0xd8] sm:$0xff]
        %v318 = vld [vmem:[#allocation2 + $0xe0] sm:$0xff]
        %v319 = vld [vmem:[#allocation2 + $0xe8] sm:$0xff]
        %v320 = vld [vmem:[#allocation2 + $0xf0] sm:$0xff]
        %v321 = vld [vmem:[#allocation2 + $0xf8] sm:$0xff]
        %v322 = vld [vmem:[%s211] sm:$0xff]
        %v323 = vld [vmem:[%s211 + $0x8] sm:$0xff]
        %v324 = vld [vmem:[%s211 + $0x10] sm:$0xff]
        %v325 = vld [vmem:[%s211 + $0x18] sm:$0xff]
        %v326 = vld [vmem:[%s211 + $0x20] sm:$0xff]
        %v327 = vld [vmem:[%s211 + $0x28] sm:$0xff]
        %v328 = vld [vmem:[%s211 + $0x30] sm:$0xff]
        %v329 = vld [vmem:[%s211 + $0x38] sm:$0xff]
        %v330 = vld [vmem:[%s211 + $0x40] sm:$0xff]
        %v331 = vld [vmem:[%s211 + $0x48] sm:$0xff]
        %v332 = vld [vmem:[%s211 + $0x50] sm:$0xff]
        %v333 = vld [vmem:[%s211 + $0x58] sm:$0xff]
        %v334 = vld [vmem:[%s211 + $0x60] sm:$0xff]
        %v335 = vld [vmem:[%s211 + $0x68] sm:$0xff]
        %v336 = vld [vmem:[%s211 + $0x70] sm:$0xff]
        %v337 = vld [vmem:[%s211 + $0x78] sm:$0xff]
        %v338 = vld [vmem:[%s211 + $0x80] sm:$0xff]
        %v339 = vld [vmem:[%s211 + $0x88] sm:$0xff]
        %v340 = vld [vmem:[%s211 + $0x90] sm:$0xff]
        %v341 = vld [vmem:[%s211 + $0x98] sm:$0xff]
        %v342 = vld [vmem:[%s211 + $0xa0] sm:$0xff]
        %v343 = vld [vmem:[%s211 + $0xa8] sm:$0xff]
        %v344 = vld [vmem:[%s211 + $0xb0] sm:$0xff]
        %v345 = vld [vmem:[%s211 + $0xb8] sm:$0xff]
        %v346 = vld [vmem:[%s211 + $0xc0] sm:$0xff]
        %v347 = vld [vmem:[%s211 + $0xc8] sm:$0xff]
        %v348 = vld [vmem:[%s211 + $0xd0] sm:$0xff]
        %v349 = vld [vmem:[%s211 + $0xd8] sm:$0xff]
        %v350 = vld [vmem:[%s211 + $0xe0] sm:$0xff]
        %v351 = vld [vmem:[%s211 + $0xe8] sm:$0xff]
        %v352 = vld [vmem:[%s211 + $0xf0] sm:$0xff]
        %v353 = vld [vmem:[%s211 + $0xf8] sm:$0xff]
        %v354 = vld [vmem:[%s221] sm:$0xf]
        %v355 = vld [vmem:[%s221 + $0x4] sm:$0xf]
        %v356 = vld [vmem:[%s221 + $0x8] sm:$0xf]
        %v357 = vld [vmem:[%s221 + $0xc] sm:$0xf]
        %v358 = vld [vmem:[%s221 + $0x10] sm:$0xf]
        %v359 = vld [vmem:[%s221 + $0x14] sm:$0xf]
        %v360 = vld [vmem:[%s221 + $0x18] sm:$0xf]
        %v361 = vld [vmem:[%s221 + $0x1c] sm:$0xf]
        %v362 = vld [vmem:[%s221 + $0x20] sm:$0xf]
        %v363 = vld [vmem:[%s221 + $0x24] sm:$0xf]
        %v364 = vld [vmem:[%s221 + $0x28] sm:$0xf]
        %v365 = vld [vmem:[%s221 + $0x2c] sm:$0xf]
        %v366 = vld [vmem:[%s221 + $0x30] sm:$0xf]
        %v367 = vld [vmem:[%s221 + $0x34] sm:$0xf]
        %v368 = vld [vmem:[%s221 + $0x38] sm:$0xf]
        %v369 = vld [vmem:[%s221 + $0x3c] sm:$0xf]
        %v370 = vld [vmem:[%s221 + $0x40] sm:$0xf]
        %v371 = vld [vmem:[%s221 + $0x44] sm:$0xf]
        %v372 = vld [vmem:[%s221 + $0x48] sm:$0xf]
        %v373 = vld [vmem:[%s221 + $0x4c] sm:$0xf]
        %v374 = vld [vmem:[%s221 + $0x50] sm:$0xf]
        %v375 = vld [vmem:[%s221 + $0x54] sm:$0xf]
        %v376 = vld [vmem:[%s221 + $0x58] sm:$0xf]
        %v377 = vld [vmem:[%s221 + $0x5c] sm:$0xf]
        %v378 = vld [vmem:[%s221 + $0x60] sm:$0xf]
        %v379 = vld [vmem:[%s221 + $0x64] sm:$0xf]
        %v380 = vld [vmem:[%s221 + $0x68] sm:$0xf]
        %v381 = vld [vmem:[%s221 + $0x6c] sm:$0xf]
        %v382 = vld [vmem:[%s221 + $0x70] sm:$0xf]
        %v383 = vld [vmem:[%s221 + $0x74] sm:$0xf]
        %v384 = vld [vmem:[%s221 + $0x78] sm:$0xf]
        %v385 = vld [vmem:[%s221 + $0x7c] sm:$0xf]
        %v418 = vunpack.c.l.b16 %v322
        %v419 = vunpack.c.h.b16 %v322
        %v420 = vunpack.c.l.b16 %v323
        %v421 = vunpack.c.h.b16 %v323
        %v422 = vunpack.c.l.b16 %v324
        %v423 = vunpack.c.h.b16 %v324
        %v424 = vunpack.c.l.b16 %v325
        %v425 = vunpack.c.h.b16 %v325
        %v426 = vunpack.c.l.b16 %v326
        %v427 = vunpack.c.h.b16 %v326
        %v428 = vunpack.c.l.b16 %v327
        %v429 = vunpack.c.h.b16 %v327
        %v430 = vunpack.c.l.b16 %v328
        %v431 = vunpack.c.h.b16 %v328
        %v432 = vunpack.c.l.b16 %v329
        %v433 = vunpack.c.h.b16 %v329
        %v434 = vunpack.c.l.b16 %v330
        %v435 = vunpack.c.h.b16 %v330
        %v436 = vunpack.c.l.b16 %v331
        %v437 = vunpack.c.h.b16 %v331
        %v438 = vunpack.c.l.b16 %v332
        %v439 = vunpack.c.h.b16 %v332
        %v440 = vunpack.c.l.b16 %v333
        %v441 = vunpack.c.h.b16 %v333
        %v442 = vunpack.c.l.b16 %v334
        %v443 = vunpack.c.h.b16 %v334
        %v444 = vunpack.c.l.b16 %v335
        %v445 = vunpack.c.h.b16 %v335
        %v446 = vunpack.c.l.b16 %v336
        %v447 = vunpack.c.h.b16 %v336
        %v448 = vunpack.c.l.b16 %v337
        %v449 = vunpack.c.h.b16 %v337
        %v450 = vunpack.c.l.b16 %v338
        %v451 = vunpack.c.h.b16 %v338
        %v452 = vunpack.c.l.b16 %v339
        %v453 = vunpack.c.h.b16 %v339
        %v454 = vunpack.c.l.b16 %v340
        %v455 = vunpack.c.h.b16 %v340
        %v456 = vunpack.c.l.b16 %v341
        %v457 = vunpack.c.h.b16 %v341
        %v458 = vunpack.c.l.b16 %v342
        %v459 = vunpack.c.h.b16 %v342
        %v460 = vunpack.c.l.b16 %v343
        %v461 = vunpack.c.h.b16 %v343
        %v462 = vunpack.c.l.b16 %v344
        %v463 = vunpack.c.h.b16 %v344
        %v464 = vunpack.c.l.b16 %v345
        %v465 = vunpack.c.h.b16 %v345
        %v466 = vunpack.c.l.b16 %v346
        %v467 = vunpack.c.h.b16 %v346
        %v468 = vunpack.c.l.b16 %v347
        %v469 = vunpack.c.h.b16 %v347
        %v470 = vunpack.c.l.b16 %v348
        %v471 = vunpack.c.h.b16 %v348
        %v472 = vunpack.c.l.b16 %v349
        %v473 = vunpack.c.h.b16 %v349
        %v474 = vunpack.c.l.b16 %v350
        %v475 = vunpack.c.h.b16 %v350
        %v476 = vunpack.c.l.b16 %v351
        %v477 = vunpack.c.h.b16 %v351
        %v478 = vunpack.c.l.b16 %v352
        %v479 = vunpack.c.h.b16 %v352
        %v480 = vunpack.c.l.b16 %v353
        %v481 = vunpack.c.h.b16 %v353
        %v482 = vpack.c.b16 %v420, %v418
        %v483 = vpack.c.b16 %v421, %v419
        %v484 = vpack.c.b16 %v424, %v422
        %v485 = vpack.c.b16 %v425, %v423
        %v486 = vpack.c.b16 %v428, %v426
        %v487 = vpack.c.b16 %v429, %v427
        %v488 = vpack.c.b16 %v432, %v430
        %v489 = vpack.c.b16 %v433, %v431
        %v490 = vpack.c.b16 %v436, %v434
        %v491 = vpack.c.b16 %v437, %v435
        %v492 = vpack.c.b16 %v440, %v438
        %v493 = vpack.c.b16 %v441, %v439
        %v494 = vpack.c.b16 %v444, %v442
        %v495 = vpack.c.b16 %v445, %v443
        %v496 = vpack.c.b16 %v448, %v446
        %v497 = vpack.c.b16 %v449, %v447
        %v498 = vpack.c.b16 %v452, %v450
        %v499 = vpack.c.b16 %v453, %v451
        %v500 = vpack.c.b16 %v456, %v454
        %v501 = vpack.c.b16 %v457, %v455
        %v502 = vpack.c.b16 %v460, %v458
        %v503 = vpack.c.b16 %v461, %v459
        %v504 = vpack.c.b16 %v464, %v462
        %v505 = vpack.c.b16 %v465, %v463
        %v506 = vpack.c.b16 %v468, %v466
        %v507 = vpack.c.b16 %v469, %v467
        %v508 = vpack.c.b16 %v472, %v470
        %v509 = vpack.c.b16 %v473, %v471
        %v510 = vpack.c.b16 %v476, %v474
        %v511 = vpack.c.b16 %v477, %v475
        %v512 = vpack.c.b16 %v480, %v478
        %v513 = vpack.c.b16 %v481, %v479
        %v578 = vunpack.c.l.b16 %v354
        %v579 = vunpack.c.l.b16 %v355
        %v580 = vunpack.c.l.b16 %v356
        %v581 = vunpack.c.l.b16 %v357
        %v582 = vunpack.c.l.b16 %v358
        %v583 = vunpack.c.l.b16 %v359
        %v584 = vunpack.c.l.b16 %v360
        %v585 = vunpack.c.l.b16 %v361
        %v586 = vunpack.c.l.b16 %v362
        %v587 = vunpack.c.l.b16 %v363
        %v588 = vunpack.c.l.b16 %v364
        %v589 = vunpack.c.l.b16 %v365
        %v590 = vunpack.c.l.b16 %v366
        %v591 = vunpack.c.l.b16 %v367
        %v592 = vunpack.c.l.b16 %v368
        %v593 = vunpack.c.l.b16 %v369
        %v594 = vunpack.c.l.b16 %v370
        %v595 = vunpack.c.l.b16 %v371
        %v596 = vunpack.c.l.b16 %v372
        %v597 = vunpack.c.l.b16 %v373
        %v598 = vunpack.c.l.b16 %v374
        %v599 = vunpack.c.l.b16 %v375
        %v600 = vunpack.c.l.b16 %v376
        %v601 = vunpack.c.l.b16 %v377
        %v602 = vunpack.c.l.b16 %v378
        %v603 = vunpack.c.l.b16 %v379
        %v604 = vunpack.c.l.b16 %v380
        %v605 = vunpack.c.l.b16 %v381
        %v606 = vunpack.c.l.b16 %v382
        %v607 = vunpack.c.l.b16 %v383
        %v608 = vunpack.c.l.b16 %v384
        %v609 = vunpack.c.l.b16 %v385
        %v610 = vpack.c.b16 %v579, %v578
        %v611 = vpack.c.b16 %v581, %v580
        %v612 = vpack.c.b16 %v583, %v582
        %v613 = vpack.c.b16 %v585, %v584
        %v614 = vpack.c.b16 %v587, %v586
        %v615 = vpack.c.b16 %v589, %v588
        %v616 = vpack.c.b16 %v591, %v590
        %v617 = vpack.c.b16 %v593, %v592
        %v618 = vpack.c.b16 %v595, %v594
        %v619 = vpack.c.b16 %v597, %v596
        %v620 = vpack.c.b16 %v599, %v598
        %v621 = vpack.c.b16 %v601, %v600
        %v622 = vpack.c.b16 %v603, %v602
        %v623 = vpack.c.b16 %v605, %v604
        %v624 = vpack.c.b16 %v607, %v606
        %v625 = vpack.c.b16 %v609, %v608
        %642 = vmatpush.bf16.msra.mxu0 %v617
        %643 = vmatpush.bf16.msra.mxu0 %v616
        %644 = vmatpush.bf16.msra.mxu0 %v615
        %645 = vmatpush.bf16.msra.mxu0 %v614
        %646 = vmatpush.bf16.msra.mxu0 %v613
        %647 = vmatpush.bf16.msra.mxu0 %v612
        %648 = vmatpush.bf16.msra.mxu0 %v611
        %649 = vmatpush.bf16.msra.mxu0 %v610
        %650 = vmatmul.bf16.gmra.mxu0 %v482
        %v651 = vpop.f32.mrf.mxu0
        %v652 = vadd.f32 0.0, %v651
        %v653 = vpop.f32.mrf.mxu0
        %v654 = vadd.f32 0.0, %v653
        %655 = vmatmul.bf16.gmra.mxu0 %v484
        %v656 = vpop.f32.mrf.mxu0
        %v657 = vadd.f32 0.0, %v656
        %v658 = vpop.f32.mrf.mxu0
        %v659 = vadd.f32 0.0, %v658
        %660 = vmatmul.bf16.gmra.mxu0 %v486
        %v661 = vpop.f32.mrf.mxu0
        %v662 = vadd.f32 0.0, %v661
        %v663 = vpop.f32.mrf.mxu0
        %v664 = vadd.f32 0.0, %v663
        %665 = vmatmul.bf16.gmra.mxu0 %v488
        %v666 = vpop.f32.mrf.mxu0
        %v667 = vadd.f32 0.0, %v666
        %v668 = vpop.f32.mrf.mxu0
        %v669 = vadd.f32 0.0, %v668
        %670 = vmatmul.bf16.gmra.mxu0 %v490
        %v671 = vpop.f32.mrf.mxu0
        %v672 = vadd.f32 0.0, %v671
        %v673 = vpop.f32.mrf.mxu0
        %v674 = vadd.f32 0.0, %v673
        %675 = vmatmul.bf16.gmra.mxu0 %v492
        %v676 = vpop.f32.mrf.mxu0
        %v677 = vadd.f32 0.0, %v676
        %v678 = vpop.f32.mrf.mxu0
        %v679 = vadd.f32 0.0, %v678
        %680 = vmatmul.bf16.gmra.mxu0 %v494
        %v681 = vpop.f32.mrf.mxu0
        %v682 = vadd.f32 0.0, %v681
        %v683 = vpop.f32.mrf.mxu0
        %v684 = vadd.f32 0.0, %v683
        %685 = vmatmul.bf16.gmra.mxu0 %v496
        %v686 = vpop.f32.mrf.mxu0
        %v687 = vadd.f32 0.0, %v686
        %v688 = vpop.f32.mrf.mxu0
        %v689 = vadd.f32 0.0, %v688
        %690 = vmatmul.bf16.gmra.mxu0 %v498
        %v691 = vpop.f32.mrf.mxu0
        %v692 = vadd.f32 0.0, %v691
        %v693 = vpop.f32.mrf.mxu0
        %v694 = vadd.f32 0.0, %v693
        %695 = vmatmul.bf16.gmra.mxu0 %v500
        %v696 = vpop.f32.mrf.mxu0
        %v697 = vadd.f32 0.0, %v696
        %v698 = vpop.f32.mrf.mxu0
        %v699 = vadd.f32 0.0, %v698
        %700 = vmatmul.bf16.gmra.mxu0 %v502
        %v701 = vpop.f32.mrf.mxu0
        %v702 = vadd.f32 0.0, %v701
        %v703 = vpop.f32.mrf.mxu0
        %v704 = vadd.f32 0.0, %v703
        %705 = vmatmul.bf16.gmra.mxu0 %v504
        %v706 = vpop.f32.mrf.mxu0
        %v707 = vadd.f32 0.0, %v706
        %v708 = vpop.f32.mrf.mxu0
        %v709 = vadd.f32 0.0, %v708
        %710 = vmatmul.bf16.gmra.mxu0 %v506
        %v711 = vpop.f32.mrf.mxu0
        %v712 = vadd.f32 0.0, %v711
        %v713 = vpop.f32.mrf.mxu0
        %v714 = vadd.f32 0.0, %v713
        %715 = vmatmul.bf16.gmra.mxu0 %v508
        %v716 = vpop.f32.mrf.mxu0
        %v717 = vadd.f32 0.0, %v716
        %v718 = vpop.f32.mrf.mxu0
        %v719 = vadd.f32 0.0, %v718
        %720 = vmatmul.bf16.gmra.mxu0 %v510
        %v721 = vpop.f32.mrf.mxu0
        %v722 = vadd.f32 0.0, %v721
        %v723 = vpop.f32.mrf.mxu0
        %v724 = vadd.f32 0.0, %v723
        %725 = vmatmul.bf16.gmra.mxu0 %v512
        %v726 = vpop.f32.mrf.mxu0
        %v727 = vadd.f32 0.0, %v726
        %v728 = vpop.f32.mrf.mxu0
        %v729 = vadd.f32 0.0, %v728
        %730 = vdwg.mxu0
        %731 = vmatpush.bf16.msra.mxu0 %v625
        %732 = vmatpush.bf16.msra.mxu0 %v624
        %733 = vmatpush.bf16.msra.mxu0 %v623
        %734 = vmatpush.bf16.msra.mxu0 %v622
        %735 = vmatpush.bf16.msra.mxu0 %v621
        %736 = vmatpush.bf16.msra.mxu0 %v620
        %737 = vmatpush.bf16.msra.mxu0 %v619
        %738 = vmatpush.bf16.msra.mxu0 %v618
        %739 = vmatmul.bf16.gmra.mxu0 %v483
        %v740 = vpop.f32.mrf.mxu0
        %v741 = vadd.f32 %v652, %v740
        %v742 = vpop.f32.mrf.mxu0
        %v743 = vadd.f32 %v654, %v742
        %744 = vmatmul.bf16.gmra.mxu0 %v485
        %v745 = vpop.f32.mrf.mxu0
        %v746 = vadd.f32 %v657, %v745
        %v747 = vpop.f32.mrf.mxu0
        %v748 = vadd.f32 %v659, %v747
        %749 = vmatmul.bf16.gmra.mxu0 %v487
        %v750 = vpop.f32.mrf.mxu0
        %v751 = vadd.f32 %v662, %v750
        %v752 = vpop.f32.mrf.mxu0
        %v753 = vadd.f32 %v664, %v752
        %754 = vmatmul.bf16.gmra.mxu0 %v489
        %v755 = vpop.f32.mrf.mxu0
        %v756 = vadd.f32 %v667, %v755
        %v757 = vpop.f32.mrf.mxu0
        %v758 = vadd.f32 %v669, %v757
        %759 = vmatmul.bf16.gmra.mxu0 %v491
        %v760 = vpop.f32.mrf.mxu0
        %v761 = vadd.f32 %v672, %v760
        %v762 = vpop.f32.mrf.mxu0
        %v763 = vadd.f32 %v674, %v762
        %764 = vmatmul.bf16.gmra.mxu0 %v493
        %v765 = vpop.f32.mrf.mxu0
        %v766 = vadd.f32 %v677, %v765
        %v767 = vpop.f32.mrf.mxu0
        %v768 = vadd.f32 %v679, %v767
        %769 = vmatmul.bf16.gmra.mxu0 %v495
        %v770 = vpop.f32.mrf.mxu0
        %v771 = vadd.f32 %v682, %v770
        %v772 = vpop.f32.mrf.mxu0
        %v773 = vadd.f32 %v684, %v772
        %774 = vmatmul.bf16.gmra.mxu0 %v497
        %v775 = vpop.f32.mrf.mxu0
        %v776 = vadd.f32 %v687, %v775
        %v777 = vpop.f32.mrf.mxu0
        %v778 = vadd.f32 %v689, %v777
        %779 = vmatmul.bf16.gmra.mxu0 %v499
        %v780 = vpop.f32.mrf.mxu0
        %v781 = vadd.f32 %v692, %v780
        %v782 = vpop.f32.mrf.mxu0
        %v783 = vadd.f32 %v694, %v782
        %784 = vmatmul.bf16.gmra.mxu0 %v501
        %v785 = vpop.f32.mrf.mxu0
        %v786 = vadd.f32 %v697, %v785
        %v787 = vpop.f32.mrf.mxu0
        %v788 = vadd.f32 %v699, %v787
        %789 = vmatmul.bf16.gmra.mxu0 %v503
        %v790 = vpop.f32.mrf.mxu0
        %v791 = vadd.f32 %v702, %v790
        %v792 = vpop.f32.mrf.mxu0
        %v793 = vadd.f32 %v704, %v792
        %794 = vmatmul.bf16.gmra.mxu0 %v505
        %v795 = vpop.f32.mrf.mxu0
        %v796 = vadd.f32 %v707, %v795
        %v797 = vpop.f32.mrf.mxu0
        %v798 = vadd.f32 %v709, %v797
        %799 = vmatmul.bf16.gmra.mxu0 %v507
        %v800 = vpop.f32.mrf.mxu0
        %v801 = vadd.f32 %v712, %v800
        %v802 = vpop.f32.mrf.mxu0
        %v803 = vadd.f32 %v714, %v802
        %804 = vmatmul.bf16.gmra.mxu0 %v509
        %v805 = vpop.f32.mrf.mxu0
        %v806 = vadd.f32 %v717, %v805
        %v807 = vpop.f32.mrf.mxu0
        %v808 = vadd.f32 %v719, %v807
        %809 = vmatmul.bf16.gmra.mxu0 %v511
        %v810 = vpop.f32.mrf.mxu0
        %v811 = vadd.f32 %v722, %v810
        %v812 = vpop.f32.mrf.mxu0
        %v813 = vadd.f32 %v724, %v812
        %814 = vmatmul.bf16.gmra.mxu0 %v513
        %v815 = vpop.f32.mrf.mxu0
        %v816 = vadd.f32 %v727, %v815
        %v817 = vpop.f32.mrf.mxu0
        %v818 = vadd.f32 %v729, %v817
        %819 = vdwg.mxu0
        %v820 = vadd.f32 %v290, %v741
        %v821 = vadd.f32 %v291, %v743
        %v822 = vadd.f32 %v292, %v746
        %v823 = vadd.f32 %v293, %v748
        %v824 = vadd.f32 %v294, %v751
        %v825 = vadd.f32 %v295, %v753
        %v826 = vadd.f32 %v296, %v756
        %v827 = vadd.f32 %v297, %v758
        %v828 = vadd.f32 %v298, %v761
        %v829 = vadd.f32 %v299, %v763
        %v830 = vadd.f32 %v300, %v766
        %v831 = vadd.f32 %v301, %v768
        %v832 = vadd.f32 %v302, %v771
        %v833 = vadd.f32 %v303, %v773
        %v834 = vadd.f32 %v304, %v776
        %v835 = vadd.f32 %v305, %v778
        %v836 = vadd.f32 %v306, %v781
        %v837 = vadd.f32 %v307, %v783
        %v838 = vadd.f32 %v308, %v786
        %v839 = vadd.f32 %v309, %v788
        %v840 = vadd.f32 %v310, %v791
        %v841 = vadd.f32 %v311, %v793
        %v842 = vadd.f32 %v312, %v796
        %v843 = vadd.f32 %v313, %v798
        %v844 = vadd.f32 %v314, %v801
        %v845 = vadd.f32 %v315, %v803
        %v846 = vadd.f32 %v316, %v806
        %v847 = vadd.f32 %v317, %v808
        %v848 = vadd.f32 %v318, %v811
        %v849 = vadd.f32 %v319, %v813
        %v850 = vadd.f32 %v320, %v816
        %v851 = vadd.f32 %v321, %v818
        %852 = vst [vmem:[#allocation2] sm:$0xff] %v820
        %853 = vst [vmem:[#allocation2 + $0x8] sm:$0xff] %v821
        %854 = vst [vmem:[#allocation2 + $0x10] sm:$0xff] %v822
        %855 = vst [vmem:[#allocation2 + $0x18] sm:$0xff] %v823
        %856 = vst [vmem:[#allocation2 + $0x20] sm:$0xff] %v824
        %857 = vst [vmem:[#allocation2 + $0x28] sm:$0xff] %v825
        %858 = vst [vmem:[#allocation2 + $0x30] sm:$0xff] %v826
        %859 = vst [vmem:[#allocation2 + $0x38] sm:$0xff] %v827
        %860 = vst [vmem:[#allocation2 + $0x40] sm:$0xff] %v828
        %861 = vst [vmem:[#allocation2 + $0x48] sm:$0xff] %v829
        %862 = vst [vmem:[#allocation2 + $0x50] sm:$0xff] %v830
        %863 = vst [vmem:[#allocation2 + $0x58] sm:$0xff] %v831
        %864 = vst [vmem:[#allocation2 + $0x60] sm:$0xff] %v832
        %865 = vst [vmem:[#allocation2 + $0x68] sm:$0xff] %v833
        %866 = vst [vmem:[#allocation2 + $0x70] sm:$0xff] %v834
        %867 = vst [vmem:[#allocation2 + $0x78] sm:$0xff] %v835
        %868 = vst [vmem:[#allocation2 + $0x80] sm:$0xff] %v836
        %869 = vst [vmem:[#allocation2 + $0x88] sm:$0xff] %v837
        %870 = vst [vmem:[#allocation2 + $0x90] sm:$0xff] %v838
        %871 = vst [vmem:[#allocation2 + $0x98] sm:$0xff] %v839
        %872 = vst [vmem:[#allocation2 + $0xa0] sm:$0xff] %v840
        %873 = vst [vmem:[#allocation2 + $0xa8] sm:$0xff] %v841
        %874 = vst [vmem:[#allocation2 + $0xb0] sm:$0xff] %v842
        %875 = vst [vmem:[#allocation2 + $0xb8] sm:$0xff] %v843
        %876 = vst [vmem:[#allocation2 + $0xc0] sm:$0xff] %v844
        %877 = vst [vmem:[#allocation2 + $0xc8] sm:$0xff] %v845
        %878 = vst [vmem:[#allocation2 + $0xd0] sm:$0xff] %v846
        %879 = vst [vmem:[#allocation2 + $0xd8] sm:$0xff] %v847
        %880 = vst [vmem:[#allocation2 + $0xe0] sm:$0xff] %v848
        %881 = vst [vmem:[#allocation2 + $0xe8] sm:$0xff] %v849
        %882 = vst [vmem:[#allocation2 + $0xf0] sm:$0xff] %v850
        %883 = vst [vmem:[#allocation2 + $0xf8] sm:$0xff] %v851
        %p884 = scmp.eq.s32.totalorder %s28, 1
        // Predicated region
        $region45: #{tpu_custom_call.1} parent=31 // pred_check
          %p885 = pneg %p884
        $region46: #{tpu_custom_call.1} parent=31 // pred_check_branch
          %887 = sbr.rel (%p885) target = $region48
        $region47: #{tpu_custom_call.1} parent=31 // pred_region
          %v888 = vld [vmem:[#allocation2] sm:$0xff]
          %v889 = vld [vmem:[#allocation2 + $0x8] sm:$0xff]
          %v890 = vld [vmem:[#allocation2 + $0x10] sm:$0xff]
          %v891 = vld [vmem:[#allocation2 + $0x18] sm:$0xff]
          %v892 = vld [vmem:[#allocation2 + $0x20] sm:$0xff]
          %v893 = vld [vmem:[#allocation2 + $0x28] sm:$0xff]
          %v894 = vld [vmem:[#allocation2 + $0x30] sm:$0xff]
          %v895 = vld [vmem:[#allocation2 + $0x38] sm:$0xff]
          %v896 = vld [vmem:[#allocation2 + $0x40] sm:$0xff]
          %v897 = vld [vmem:[#allocation2 + $0x48] sm:$0xff]
          %v898 = vld [vmem:[#allocation2 + $0x50] sm:$0xff]
          %v899 = vld [vmem:[#allocation2 + $0x58] sm:$0xff]
          %v900 = vld [vmem:[#allocation2 + $0x60] sm:$0xff]
          %v901 = vld [vmem:[#allocation2 + $0x68] sm:$0xff]
          %v902 = vld [vmem:[#allocation2 + $0x70] sm:$0xff]
          %v903 = vld [vmem:[#allocation2 + $0x78] sm:$0xff]
          %v904 = vld [vmem:[#allocation2 + $0x80] sm:$0xff]
          %v905 = vld [vmem:[#allocation2 + $0x88] sm:$0xff]
          %v906 = vld [vmem:[#allocation2 + $0x90] sm:$0xff]
          %v907 = vld [vmem:[#allocation2 + $0x98] sm:$0xff]
          %v908 = vld [vmem:[#allocation2 + $0xa0] sm:$0xff]
          %v909 = vld [vmem:[#allocation2 + $0xa8] sm:$0xff]
          %v910 = vld [vmem:[#allocation2 + $0xb0] sm:$0xff]
          %v911 = vld [vmem:[#allocation2 + $0xb8] sm:$0xff]
          %v912 = vld [vmem:[#allocation2 + $0xc0] sm:$0xff]
          %v913 = vld [vmem:[#allocation2 + $0xc8] sm:$0xff]
          %v914 = vld [vmem:[#allocation2 + $0xd0] sm:$0xff]
          %v915 = vld [vmem:[#allocation2 + $0xd8] sm:$0xff]
          %v916 = vld [vmem:[#allocation2 + $0xe0] sm:$0xff]
          %v917 = vld [vmem:[#allocation2 + $0xe8] sm:$0xff]
          %v918 = vld [vmem:[#allocation2 + $0xf0] sm:$0xff]
          %v919 = vld [vmem:[#allocation2 + $0xf8] sm:$0xff]
          %v920 = vld [vmem:[%s2] sm:$0x1]
          %v922 = vperm.slane %v920, 0
          %v924 = vadd.f32 %v888, %v922
          %v925 = vadd.f32 %v889, %v922
          %v926 = vadd.f32 %v890, %v922
          %v927 = vadd.f32 %v891, %v922
          %v928 = vadd.f32 %v892, %v922
          %v929 = vadd.f32 %v893, %v922
          %v930 = vadd.f32 %v894, %v922
          %v931 = vadd.f32 %v895, %v922
          %v932 = vadd.f32 %v896, %v922
          %v933 = vadd.f32 %v897, %v922
          %v934 = vadd.f32 %v898, %v922
          %v935 = vadd.f32 %v899, %v922
          %v936 = vadd.f32 %v900, %v922
          %v937 = vadd.f32 %v901, %v922
          %v938 = vadd.f32 %v902, %v922
          %v939 = vadd.f32 %v903, %v922
          %v940 = vadd.f32 %v904, %v922
          %v941 = vadd.f32 %v905, %v922
          %v942 = vadd.f32 %v906, %v922
          %v943 = vadd.f32 %v907, %v922
          %v944 = vadd.f32 %v908, %v922
          %v945 = vadd.f32 %v909, %v922
          %v946 = vadd.f32 %v910, %v922
          %v947 = vadd.f32 %v911, %v922
          %v948 = vadd.f32 %v912, %v922
          %v949 = vadd.f32 %v913, %v922
          %v950 = vadd.f32 %v914, %v922
          %v951 = vadd.f32 %v915, %v922
          %v952 = vadd.f32 %v916, %v922
          %v953 = vadd.f32 %v917, %v922
          %v954 = vadd.f32 %v918, %v922
          %v955 = vadd.f32 %v919, %v922
          %v956 = vmax.f32 %v924, 0.0
          %v957 = vmax.f32 %v925, 0.0
          %v958 = vmax.f32 %v926, 0.0
          %v959 = vmax.f32 %v927, 0.0
          %v960 = vmax.f32 %v928, 0.0
          %v961 = vmax.f32 %v929, 0.0
          %v962 = vmax.f32 %v930, 0.0
          %v963 = vmax.f32 %v931, 0.0
          %v964 = vmax.f32 %v932, 0.0
          %v965 = vmax.f32 %v933, 0.0
          %v966 = vmax.f32 %v934, 0.0
          %v967 = vmax.f32 %v935, 0.0
          %v968 = vmax.f32 %v936, 0.0
          %v969 = vmax.f32 %v937, 0.0
          %v970 = vmax.f32 %v938, 0.0
          %v971 = vmax.f32 %v939, 0.0
          %v972 = vmax.f32 %v940, 0.0
          %v973 = vmax.f32 %v941, 0.0
          %v974 = vmax.f32 %v942, 0.0
          %v975 = vmax.f32 %v943, 0.0
          %v976 = vmax.f32 %v944, 0.0
          %v977 = vmax.f32 %v945, 0.0
          %v978 = vmax.f32 %v946, 0.0
          %v979 = vmax.f32 %v947, 0.0
          %v980 = vmax.f32 %v948, 0.0
          %v981 = vmax.f32 %v949, 0.0
          %v982 = vmax.f32 %v950, 0.0
          %v983 = vmax.f32 %v951, 0.0
          %v984 = vmax.f32 %v952, 0.0
          %v985 = vmax.f32 %v953, 0.0
          %v986 = vmax.f32 %v954, 0.0
          %v987 = vmax.f32 %v955, 0.0
          %v988 = vpack.c.bf16 %v956, %v956
          %v989 = vpack.c.bf16 %v957, %v957
          %v990 = vpack.c.bf16 %v958, %v958
          %v991 = vpack.c.bf16 %v959, %v959
          %v992 = vpack.c.bf16 %v960, %v960
          %v993 = vpack.c.bf16 %v961, %v961
          %v994 = vpack.c.bf16 %v962, %v962
          %v995 = vpack.c.bf16 %v963, %v963
          %v996 = vpack.c.bf16 %v964, %v964
          %v997 = vpack.c.bf16 %v965, %v965
          %v998 = vpack.c.bf16 %v966, %v966
          %v999 = vpack.c.bf16 %v967, %v967
          %v1000 = vpack.c.bf16 %v968, %v968
          %v1001 = vpack.c.bf16 %v969, %v969
          %v1002 = vpack.c.bf16 %v970, %v970
          %v1003 = vpack.c.bf16 %v971, %v971
          %v1004 = vpack.c.bf16 %v972, %v972
          %v1005 = vpack.c.bf16 %v973, %v973
          %v1006 = vpack.c.bf16 %v974, %v974
          %v1007 = vpack.c.bf16 %v975, %v975
          %v1008 = vpack.c.bf16 %v976, %v976
          %v1009 = vpack.c.bf16 %v977, %v977
          %v1010 = vpack.c.bf16 %v978, %v978
          %v1011 = vpack.c.bf16 %v979, %v979
          %v1012 = vpack.c.bf16 %v980, %v980
          %v1013 = vpack.c.bf16 %v981, %v981
          %v1014 = vpack.c.bf16 %v982, %v982
          %v1015 = vpack.c.bf16 %v983, %v983
          %v1016 = vpack.c.bf16 %v984, %v984
          %v1017 = vpack.c.bf16 %v985, %v985
          %v1018 = vpack.c.bf16 %v986, %v986
          %v1019 = vpack.c.bf16 %v987, %v987
          %1020 = vst [vmem:[%s249] sm:$0xf] %v988
          %1021 = vst [vmem:[%s249 + $0x4] sm:$0xf] %v989
          %1022 = vst [vmem:[%s249 + $0x8] sm:$0xf] %v990
          %1023 = vst [vmem:[%s249 + $0xc] sm:$0xf] %v991
          %1024 = vst [vmem:[%s249 + $0x10] sm:$0xf] %v992
          %1025 = vst [vmem:[%s249 + $0x14] sm:$0xf] %v993
          %1026 = vst [vmem:[%s249 + $0x18] sm:$0xf] %v994
          %1027 = vst [vmem:[%s249 + $0x1c] sm:$0xf] %v995
          %1028 = vst [vmem:[%s249 + $0x20] sm:$0xf] %v996
          %1029 = vst [vmem:[%s249 + $0x24] sm:$0xf] %v997
          %1030 = vst [vmem:[%s249 + $0x28] sm:$0xf] %v998
          %1031 = vst [vmem:[%s249 + $0x2c] sm:$0xf] %v999
          %1032 = vst [vmem:[%s249 + $0x30] sm:$0xf] %v1000
          %1033 = vst [vmem:[%s249 + $0x34] sm:$0xf] %v1001
          %1034 = vst [vmem:[%s249 + $0x38] sm:$0xf] %v1002
          %1035 = vst [vmem:[%s249 + $0x3c] sm:$0xf] %v1003
          %1036 = vst [vmem:[%s249 + $0x40] sm:$0xf] %v1004
          %1037 = vst [vmem:[%s249 + $0x44] sm:$0xf] %v1005
          %1038 = vst [vmem:[%s249 + $0x48] sm:$0xf] %v1006
          %1039 = vst [vmem:[%s249 + $0x4c] sm:$0xf] %v1007
          %1040 = vst [vmem:[%s249 + $0x50] sm:$0xf] %v1008
          %1041 = vst [vmem:[%s249 + $0x54] sm:$0xf] %v1009
          %1042 = vst [vmem:[%s249 + $0x58] sm:$0xf] %v1010
          %1043 = vst [vmem:[%s249 + $0x5c] sm:$0xf] %v1011
          %1044 = vst [vmem:[%s249 + $0x60] sm:$0xf] %v1012
          %1045 = vst [vmem:[%s249 + $0x64] sm:$0xf] %v1013
          %1046 = vst [vmem:[%s249 + $0x68] sm:$0xf] %v1014
          %1047 = vst [vmem:[%s249 + $0x6c] sm:$0xf] %v1015
          %1048 = vst [vmem:[%s249 + $0x70] sm:$0xf] %v1016
          %1049 = vst [vmem:[%s249 + $0x74] sm:$0xf] %v1017
          %1050 = vst [vmem:[%s249 + $0x78] sm:$0xf] %v1018
          %1051 = vst [vmem:[%s249 + $0x7c] sm:$0xf] %v1019
        $region48: #{tpu_custom_call.1} parent=31 // pred_fallthru
          _
        %s1052 = sand.u32 %s118, 1
        %s1053 = scalar_lea.sflag [#allocation5], %s1052
        %s1054 = sand.u32 %s118, 1
        %s1055 = smul.addr %s1054, 128
        %s1056 = scalar_lea.vmem [#allocation8], %s1055
        // Predicated region
        $region49: #{tpu_custom_call.1} parent=31 // pred_check
          %p1057 = pneg %p128
        $region50: #{tpu_custom_call.1} parent=31 // pred_check_branch
          %1059 = sbr.rel (%p1057) target = $region52
        $region51: #{tpu_custom_call.1} parent=31 // pred_region
          %s1060 = smul.u32 32, %s27
          %1062 = vsyncadd %s1053, 0
          %s1063 = smul.addr %s1060, 4
          %s1064 = scalar_lea.hbm %s3, %s1063
          %s1065 = sshll.u32 %s1056, 4
          %s1066 = int_to_ptr.vmem [resolvable:$true] %s1065
          %s1067 = sshll.u32 %s1064, 4
          %s1068 = int_to_ptr.hbm [resolvable:$true] %s1067
          %1073 = dma.vmem_to_hbm [thread:$0]  %s1066, 2048, %s1068, %s1053, 64, 64, 4
        $region52: #{tpu_custom_call.1} parent=31 // pred_fallthru
          _
      $region32: #{tpu_custom_call.1} parent=5 // pred_fallthru
        _
      %p1074 = scmp.le.s32.totalorder 2, %s18
      // Predicated region
      $region53: #{tpu_custom_call.1} parent=5 // pred_check
        %p1075 = pneg %p1074
      $region54: #{tpu_custom_call.1} parent=5 // pred_check_branch
        %1077 = sbr.rel (%p1075) target = $region56
      $region55: #{tpu_custom_call.1} parent=5 // pred_region
        %s1078 = ssub.s32 %s18, 2
        // Predicated region
        $region57: #{tpu_custom_call.1} parent=55 // pred_check
          %p1079 = pneg %p134
        $region58: #{tpu_custom_call.1} parent=55 // pred_check_branch
          %1081 = sbr.rel (%p1079) target = $region60
        $region59: #{tpu_custom_call.1} parent=55 // pred_region
          %s1082 = sand.u32 %s119, 1
          %s1083 = scalar_lea.sflag [#allocation5], %s1082
          %s1084 = sand.u32 %s119, 1
          %s1085 = smul.addr %s1084, 128
          %s1086 = scalar_lea.vmem [#allocation8], %s1085
          %1088 = dma.done %s1083, 2048
        $region60: #{tpu_custom_call.1} parent=55 // pred_fallthru
          _
      $region56: #{tpu_custom_call.1} parent=5 // pred_fallthru
        _
    $region6: #{tpu_custom_call.1} parent=1 // loop_footer
      %s22 = sadd.s32 1, %s18
    $region7: #{tpu_custom_call.1} parent=1 // loop_footer_branch
      %17 = sbr.rel target = $region3
    $region8: #{tpu_custom_call.1} parent=1 // loop_exit
      _
    %1089 = vsyncpa [#allocation4], 1
    %s1090 = scalar_lea.sflag [#allocation4], 1
    %1091 = vsyncpa %s1090, 1
    %1092 = vsyncpa [#allocation7], 1
    %s1093 = scalar_lea.sflag [#allocation7], 1
    %1094 = vsyncpa %s1093, 1
    %1095 = vsyncpa [#allocation5], 1
    %s1096 = scalar_lea.sflag [#allocation5], 1
    %1097 = vsyncpa %s1096, 1

</llo_original>
